<compile_context>
chip_gen: v7x
topology: tpu7x:2x2x1
jax: 0.10.0
libtpu: 0.0.40
codegen_flags: <defaults>
</compile_context>

<pallas_src>
import functools

import jax
import jax.numpy as jnp
from jax import lax
from jax.experimental import pallas as pl
from jax.experimental.pallas import tpu as pltpu

LANE = 128          # vreg lane width
BLOCK_ROWS = 4096   # (4096, 128) f32 block = 2 MiB -> ~8 MiB double-buffered
SINGLE_ROWS = 8192  # whole-array-resident-in-VMEM threshold (4 MiB of f32)


def _zero_mean_single_kernel(x_ref, o_ref):
    """Whole array resident in VMEM: reduce + rewrite in one shot."""
    xf = x_ref[...].astype(jnp.float32)
    off = -(jnp.min(xf) + jnp.max(xf))            # 2x - min - max == 2x + off
    o_ref[...] = (2.0 * xf + off).astype(o_ref.dtype)


def _zero_mean_phased_kernel(x_ref, o_ref, mn_acc, mx_acc, off_ref, *,
                             valid_rows_last):
    """grid = (2, num_blocks): phase 0 = global min/max, phase 1 = rewrite."""
    phase = pl.program_id(0)
    j = pl.program_id(1)
    nb = pl.num_programs(1)
    needs_mask = valid_rows_last != BLOCK_ROWS    # static Python bool

    @pl.when(phase == 0)
    def _reduce():
        @pl.when(j == 0)
        def _():
            mn_acc[...] = jnp.full((8, LANE), jnp.inf, jnp.float32)
            mx_acc[...] = jnp.full((8, LANE), -jnp.inf, jnp.float32)

        xf = x_ref[...].astype(jnp.float32)       # in-kernel cast (VPU, free)
        if needs_mask:
            # Only compiled in when the last block is partial; mask its
            # out-of-bounds (undefined) rows with +/-inf identities.
            limit = jnp.where(j == nb - 1, valid_rows_last, BLOCK_ROWS)
            row_id = lax.broadcasted_iota(jnp.int32, xf.shape, 0)
            valid = row_id < limit
            x_mn = jnp.where(valid, xf, jnp.inf)
            x_mx = jnp.where(valid, xf, -jnp.inf)
        else:
            x_mn = x_mx = xf

        # Fold the (BLOCK_ROWS, 128) tile into vreg-shaped (8,128) partials.
        # Reduce is over the leading (tile-group) axis -> pure VPU, no XLU.
        mn_acc[...] = jnp.minimum(mn_acc[...],
                                  jnp.min(x_mn.reshape(-1, 8, LANE), axis=0))
        mx_acc[...] = jnp.maximum(mx_acc[...],
                                  jnp.max(x_mx.reshape(-1, 8, LANE), axis=0))

        @pl.when(j == nb - 1)
        def _():
            # Single cross-lane reduce at the very end; the scalar offset
            # lives in VMEM scratch so nothing round-trips through HBM
            # between the two phases.
            off_ref[...] = -(jnp.min(mn_acc[...], keepdims=True)
                             + jnp.max(mx_acc[...], keepdims=True))

    @pl.when(phase == 1)
    def _rewrite():
        o_ref[...] = (2.0 * x_ref[...].astype(jnp.float32)
                      + off_ref[...]).astype(o_ref.dtype)


def _zero_mean_impl(x):
    orig_shape = x.shape
    orig_dtype = x.dtype
    n = x.size
    if n == 0:
        return x

    flat = x.reshape(-1)
    pad = (-n) % LANE
    if pad:
        # Edge-replicate: pad values are existing elements, so the global
        # min/max are unchanged; padded outputs are sliced off below.  The
        # common lane-aligned case (n % 128 == 0) takes no pad and no slice.
        flat = jnp.pad(flat, (0, pad), mode="edge")
    rows = flat.size // LANE
    x2 = flat.reshape(rows, LANE)

    if rows <= SINGLE_ROWS:
        # Whole array resident in VMEM: 1 HBM read + 1 HBM write, one launch.
        y2 = pl.pallas_call(
            _zero_mean_single_kernel,
            out_shape=jax.ShapeDtypeStruct((rows, LANE), orig_dtype),
        )(x2)
    else:
        nb = pl.cdiv(rows, BLOCK_ROWS)
        valid_rows_last = rows - (nb - 1) * BLOCK_ROWS
        kernel = functools.partial(_zero_mean_phased_kernel,
                                   valid_rows_last=valid_rows_last)
        y2 = pl.pallas_call(
            kernel,
            out_shape=jax.ShapeDtypeStruct((rows, LANE), orig_dtype),
            grid=(2, nb),
            in_specs=[pl.BlockSpec((BLOCK_ROWS, LANE), lambda p, j: (j, 0))],
            # p*j pins the output block at 0 during phase 0 (no garbage
            # writebacks); phase 1 writes each block exactly once.
            out_specs=pl.BlockSpec((BLOCK_ROWS, LANE), lambda p, j: (p * j, 0)),
            scratch_shapes=[
                pltpu.VMEM((8, LANE), jnp.float32),   # per-lane min accum
                pltpu.VMEM((8, LANE), jnp.float32),   # per-lane max accum
                pltpu.VMEM((1, 1), jnp.float32),      # -(min + max) offset
            ],
            compiler_params=pltpu.CompilerParams(
                dimension_semantics=("arbitrary", "arbitrary")),
        )(x2)

    if pad:
        y2 = y2.reshape(-1)[:n]
    return y2.reshape(orig_shape)


zero_mean = jax.jit(_zero_mean_impl)


def zero_mean_ref(x):
    x = x - jnp.min(x)
    x = 2.0 * x - jnp.max(x)
    return x.astype(x.dtype)


if __name__ == "__main__":
    key = jax.random.PRNGKey(0)
    k1, k2, k3 = jax.random.split(key, 3)

    # Small NCHW input (PyTorch conv-style layout) -> whole-array VMEM path.
    x_small = jax.random.normal(k1, (2, 4, 16, 16), dtype=jnp.float32)
    out_small = jax.block_until_ready(zero_mean(x_small))
    ref_small = zero_mean_ref(x_small)
    assert out_small.shape == x_small.shape and out_small.dtype == x_small.dtype
    assert jnp.allclose(out_small, ref_small, atol=1e-5, rtol=1e-5), "small mismatch"

    # Tiny non-lane-aligned input -> edge-pad + slice path.
    x_odd = jax.random.normal(k2, (2, 3, 5, 7), dtype=jnp.float32)
    out_odd = jax.block_until_ready(zero_mean(x_odd))
    ref_odd = zero_mean_ref(x_odd)
    assert out_odd.shape == x_odd.shape and out_odd.dtype == x_odd.dtype
    assert jnp.allclose(out_odd, ref_odd, atol=1e-5, rtol=1e-5), "odd mismatch"

    # Larger input exercising the fused two-phase path + partial tail block
    # (16640 rows -> 5 blocks of 4096, last block has 256 valid rows).
    x_large = jax.random.normal(k3, (2, 4, 512, 520), dtype=jnp.float32)
    out_large = jax.block_until_ready(zero_mean(x_large))
    ref_large = zero_mean_ref(x_large)
    assert out_large.shape == x_large.shape and out_large.dtype == x_large.dtype
    assert jnp.allclose(out_large, ref_large, atol=1e-5, rtol=1e-5), "large mismatch"

    print("KERNEL_OK")
</pallas_src>

<mosaic_0001>
module attributes {stable_mosaic.version = 11 : i64} {
  func.func @_zero_mean_single_kernel(%arg0: memref<16x128xf32, #tpu.memory_space<vmem>>, %arg1: memref<16x128xf32, #tpu.memory_space<vmem>>) attributes {dimension_semantics = [], scalar_prefetch = 0 : i64, scratch_operands = 0 : i64, tpu.core_type = #tpu.core_type<tc>} {
    %c0 = arith.constant 0 : index
    %c0_0 = arith.constant 0 : index
    %0 = vector.load %arg0[%c0, %c0_0] : memref<16x128xf32, #tpu.memory_space<vmem>>, vector<16x128xf32>
    %1 = vector.shape_cast %0 : vector<16x128xf32> to vector<1x16x128xf32>
    %cst = arith.constant dense<0x7F800000> : vector<1xf32>
    %2 = vector.multi_reduction <minimumf>, %1, %cst [1, 2] : vector<1x16x128xf32> to vector<1xf32>
    %3 = vector.shape_cast %2 : vector<1xf32> to vector<1x1x1xf32>
    %4 = vector.extract %3[0, 0, 0] : f32 from vector<1x1x1xf32>
    %5 = vector.shape_cast %0 : vector<16x128xf32> to vector<1x16x128xf32>
    %cst_1 = arith.constant dense<0xFF800000> : vector<1xf32>
    %6 = vector.multi_reduction <maximumf>, %5, %cst_1 [1, 2] : vector<1x16x128xf32> to vector<1xf32>
    %7 = vector.shape_cast %6 : vector<1xf32> to vector<1x1x1xf32>
    %8 = vector.extract %7[0, 0, 0] : f32 from vector<1x1x1xf32>
    %9 = arith.addf %4, %8 : f32
    %cst_2 = arith.constant 0.000000e+00 : f32
    %10 = arith.subf %cst_2, %9 : f32
    %cst_3 = arith.constant 2.000000e+00 : f32
    %11 = vector.broadcast %cst_3 : f32 to vector<16x128xf32>
    %12 = arith.mulf %11, %0 : vector<16x128xf32>
    %13 = vector.broadcast %10 : f32 to vector<16x128xf32>
    %14 = arith.addf %12, %13 : vector<16x128xf32>
    %c0_4 = arith.constant 0 : index
    %c0_5 = arith.constant 0 : index
    %15 = vector.load %arg1[%c0_4, %c0_5] : memref<16x128xf32, #tpu.memory_space<vmem>>, vector<16x128xf32>
    tpu.vector_store %arg1[%c0_4, %c0_5], %14 {strides = array<i32>} : memref<16x128xf32, #tpu.memory_space<vmem>>, vector<16x128xf32>,
    return
  }
}

</mosaic_0001>

<llo_original>
// kernel: _zero_mean_impl.1
$region0: #{_zero_mean_impl.1}
  #allocation0 [shape = 'u32[]', space=smem, size = 0x4, offset = 0x4, fixed_abs, tag = 'smem constant byte address 0x4 - core index']
  #allocation1 [shape = 'u32[144,128]{1,0:T(1,128)}', space=vmem, size = 0x12000, scoped, tag = 'internal scratch']
  %s0 = inlined_call_operand.vmem [shape: f32[16,128], index: 0, kind: input, shape index: {}]
  %s1 = inlined_call_operand.vmem [shape: f32[16,128], index: 1, kind: output, shape index: {}]
  %s2 = sld [smem:[#allocation0]]
  $region14: #{_zero_mean_impl.1} parent=0
    _
  %s4 = ssub.s32 1, %s2
  %s5 = scalar_select 0, %s4, %s2
  // Predicated region
  $region2: #{_zero_mean_impl.1} parent=0 // pred_check
    _
  $region3: #{_zero_mean_impl.1} parent=0 // pred_check_branch
    %7 = sbr.rel (0) target = $region5
  $region4: #{_zero_mean_impl.1} parent=0 // pred_region
    _
  $region5: #{_zero_mean_impl.1} parent=0 // pred_fallthru
    _
  %v8 = vld [vmem:[%s0] sm:$0xff]
  %v9 = vld [vmem:[%s0 + $0x8] sm:$0xff]
  %v10 = vmin.f32 %v8, %v9
  %11 = vmin.xlane.f32.xlu0 %v10
  %v12 = vpop.xlane.xlu0 %11
  %v13 = vrot.slane %v12, 4
  %v14 = vmin.f32 %v12, %v13
  %v15 = vrot.slane %v14, 2
  %v16 = vmin.f32 %v14, %v15
  %v17 = vrot.slane %v16, 1
  %v18 = vmin.f32 %v16, %v17
  %s19 = vtos %v18
  %v20 = vmax.f32 %v8, %v9
  %21 = vmax.xlane.f32.xlu0 %v20
  %v22 = vpop.xlane.xlu0 %21
  %v23 = vrot.slane %v22, 4
  %v24 = vmax.f32 %v22, %v23
  %v25 = vrot.slane %v24, 2
  %v26 = vmax.f32 %v24, %v25
  %v27 = vrot.slane %v26, 1
  %v28 = vmax.f32 %v26, %v27
  %s29 = vtos %v28
  %s30 = sadd.f32 %s19, %s29
  %s31 = ssub.f32 0.0, %s30
  %v32 = vmul.f32 %v8, 2.0
  %v33 = vmul.f32 %v9, 2.0
  %v34 = vstv %s31
  %v35 = vadd.f32 %v32, %v34
  %v36 = vadd.f32 %v33, %v34
  %37 = vst [vmem:[%s1] sm:$0xff] %v35
  %38 = vst [vmem:[%s1 + $0x8] sm:$0xff] %v36
  // Predicated region
  $region6: #{_zero_mean_impl.1} parent=0 // pred_check
    _
  $region7: #{_zero_mean_impl.1} parent=0 // pred_check_branch
    %40 = sbr.rel (0) target = $region9
  $region8: #{_zero_mean_impl.1} parent=0 // pred_region
    _
  $region9: #{_zero_mean_impl.1} parent=0 // pred_fallthru
    _
  // Predicated region
  $region10: #{_zero_mean_impl.1} parent=0 // pred_check
    _
  $region11: #{_zero_mean_impl.1} parent=0 // pred_check_branch
    %42 = sbr.rel (0) target = $region13
  $region12: #{_zero_mean_impl.1} parent=0 // pred_region
    _
  $region13: #{_zero_mean_impl.1} parent=0 // pred_fallthru
    _

</llo_original>
